<compile_context>
chip_gen: v5e
topology: v5e:2x2
jax: 0.10.0
libtpu: 0.0.40
codegen_flags: <defaults>
</compile_context>

<pallas_src>
import jax
import jax.numpy as jnp
from jax.experimental import pallas as pl
from jax.experimental.pallas import tpu as pltpu


# ----------------------------------------------------------------------------
# Pallas kernel: fused per-head weighted cross entropy
#   F.cross_entropy(logits, targets, weight), reduction='mean':
#     loss_h = sum_i w[y_i] * nll_i / sum_i w[y_i]
# Grid = (H, N_tiles).  Accumulates (num, den) per head in a VMEM scratch and
# writes loss_h = num/den on the last N tile.
# ----------------------------------------------------------------------------
def _fused_wce_kernel(logits_ref, targets_ref, weight_ref, out_ref, acc_ref):
    i = pl.program_id(1)

    @pl.when(i == 0)
    def _init():
        acc_ref[...] = jnp.zeros_like(acc_ref)

    x = logits_ref[0].astype(jnp.float32)      # [TILE_N, K]  upcast in VMEM
    t = targets_ref[0]                         # [TILE_N, 1]  i32 (padded rows = -1)
    w = weight_ref[...]                        # [1, K]       f32

    n, k = x.shape
    cls_ids = jax.lax.broadcasted_iota(jnp.int32, (n, k), 1)
    mask = cls_ids == t                        # [TILE_N, K] bool (all-False on pad rows)

    # numerically-stable log-sum-exp (exp -> EUP slot, cheap)
    m = jnp.max(x, axis=-1, keepdims=True)                              # [TILE_N, 1]
    lse = m + jnp.log(jnp.sum(jnp.exp(x - m), axis=-1, keepdims=True))  # [TILE_N, 1]

    x_tgt = jnp.sum(jnp.where(mask, x, 0.0), axis=-1, keepdims=True)    # logit @ target
    w_row = jnp.sum(jnp.where(mask, w, 0.0), axis=-1, keepdims=True)    # weight[target]

    nll = lse - x_tgt                                                   # -log p(target)

    num = jnp.sum(w_row * nll, axis=(0, 1), keepdims=True)              # [1, 1]
    den = jnp.sum(w_row, axis=(0, 1), keepdims=True)                    # [1, 1]

    acc_ref[:, 0:1] += num
    acc_ref[:, 1:2] += den

    @pl.when(i == pl.num_programs(1) - 1)
    def _finalize():
        # exact divide (loss value precision matters); single scalar store per head
        out_ref[...] = (acc_ref[:, 0:1] / acc_ref[:, 1:2]).reshape(1, 1, 1)


def _round_up(x, m):
    return ((x + m - 1) // m) * m


def _pick_tile_n(n, k):
    """Largest tile that (a) avoids padding for small N, (b) stays well inside
    the default VMEM limit with double buffering for large N."""
    # ~4 MiB per f32 logits tile -> x2 double-buffer = 8 MiB, plenty of headroom
    vmem_rows = max(8, ((4 * 1024 * 1024) // (max(k, 1) * 4)) // 8 * 8)
    cap = min(2048, vmem_rows)
    return min(cap, _round_up(n, 8))


def fused_weighted_cross_entropy(logits_stacked, targets_stacked, empty_weight):
    """Fused weighted CE over stacked heads.

    logits_stacked : [H, N, K]  (model dtype; upcast to f32 inside the kernel)
    targets_stacked: [H, N]     int32 class ids
    empty_weight   : [K]        per-class weights
    Returns        : [H]        f32 losses (one per head)
    """
    h, n, k = logits_stacked.shape

    tile_n = _pick_tile_n(n, k)
    n_pad = _round_up(n, tile_n)

    targets_stacked = targets_stacked.astype(jnp.int32)
    if n_pad > n:
        logits_stacked = jnp.pad(logits_stacked, ((0, 0), (0, n_pad - n), (0, 0)))
        # pad rows get target -1 -> never matches a class -> weight 0 -> no effect
        targets_stacked = jnp.pad(
            targets_stacked, ((0, 0), (0, n_pad - n)), constant_values=-1)
    targets_3d = targets_stacked[..., None]                      # [H, N_pad, 1]
    weight_2d = empty_weight.reshape(1, k).astype(jnp.float32)   # [1, K]

    out = pl.pallas_call(
        _fused_wce_kernel,
        out_shape=jax.ShapeDtypeStruct((h, 1, 1), jnp.float32),
        grid_spec=pltpu.PrefetchScalarGridSpec(
            num_scalar_prefetch=0,
            grid=(h, n_pad // tile_n),
            in_specs=[
                pl.BlockSpec((1, tile_n, k), lambda hh, ii: (hh, ii, 0)),
                pl.BlockSpec((1, tile_n, 1), lambda hh, ii: (hh, ii, 0)),
                pl.BlockSpec((1, k), lambda hh, ii: (0, 0)),
            ],
            out_specs=pl.BlockSpec((1, 1, 1), lambda hh, ii: (hh, 0, 0)),
            scratch_shapes=[pltpu.VMEM((1, 2), jnp.float32)],
        ),
        compiler_params=pltpu.CompilerParams(
            dimension_semantics=("parallel", "arbitrary")),
    )(logits_stacked, targets_3d, weight_2d)

    return out[:, 0, 0]


# ----------------------------------------------------------------------------
# SetCriterion (JAX glue around the fused Pallas hot path)
# ----------------------------------------------------------------------------
class SetCriterion:
    def __init__(self, num_classes, matcher, weight_dict, eos_coef, losses, ec_weight):
        self.num_classes = num_classes
        self.matcher = matcher
        self.weight_dict = weight_dict
        self.eos_coef = eos_coef
        self.losses = losses
        empty_weight = 1.0 / ec_weight
        if self.eos_coef > 0:
            empty_weight = empty_weight.at[-1].set(self.eos_coef)
        self.empty_weight = empty_weight  # [num_classes + 1]

    def _get_src_permutation_idx(self, indices):
        batch_idx = jnp.concatenate(
            [jnp.full_like(src, i) for i, (src, _) in enumerate(indices)])
        src_idx = jnp.concatenate([src for src, _ in indices])
        return batch_idx, src_idx

    def _target_classes(self, b, q, targets, indices):
        batch_idx, src_idx = self._get_src_permutation_idx(indices)
        target_classes_o = jnp.concatenate(
            [t['labels'][J] for t, (_, J) in zip(targets, indices)]).astype(jnp.int32)
        tc = jnp.full((b, q), self.num_classes, dtype=jnp.int32)
        return tc.at[batch_idx, src_idx].set(target_classes_o)

    # single-head path (kept for get_loss API compatibility) -----------------
    def loss_labels(self, outputs, targets, indices, num_boxes, log=False):
        src_logits = outputs['pred_logits']                       # [B, Q, K]
        b, q, k = src_logits.shape
        tc = self._target_classes(b, q, targets, indices)
        loss = fused_weighted_cross_entropy(
            src_logits.reshape(1, b * q, k),
            tc.reshape(1, b * q),
            self.empty_weight)[0]
        return {'loss_ce': loss}

    def get_loss(self, loss, outputs, targets, indices, num_boxes, **kwargs):
        loss_map = {'labels': self.loss_labels}
        assert loss in loss_map
        return loss_map[loss](outputs, targets, indices, num_boxes, **kwargs)

    # fused forward: main head + all aux heads in ONE pallas_call -------------
    def forward(self, outputs, targets):
        assert set(self.losses) <= {'labels'}, "only the 'labels' loss is implemented"
        outputs_without_aux = {k: v for k, v in outputs.items() if k != 'aux_outputs'}

        head_logits = [outputs['pred_logits']]
        head_indices = [self.matcher(outputs_without_aux, targets)]
        head_names = ['loss_ce']
        if 'aux_outputs' in outputs:
            for i, aux_outputs in enumerate(outputs['aux_outputs']):
                head_logits.append(aux_outputs['pred_logits'])
                head_indices.append(self.matcher(aux_outputs, targets))
                head_names.append(f'loss_ce_{i}')

        b, q, k = head_logits[0].shape
        h = len(head_logits)
        logits_stacked = jnp.stack(head_logits, axis=0).reshape(h, b * q, k)
        tc_stacked = jnp.stack(
            [self._target_classes(b, q, targets, idx) for idx in head_indices],
            axis=0).reshape(h, b * q)

        # num_boxes is 1 in the reference and unused by the labels loss.
        losses_vec = fused_weighted_cross_entropy(
            logits_stacked, tc_stacked, self.empty_weight)

        return {name: losses_vec[i] for i, name in enumerate(head_names)}

    __call__ = forward


# TODO(synk): the DETR HungarianMatcher (scipy linear_sum_assignment on a
# class/box cost matrix) has no clean Pallas equivalent; replaced with a
# deterministic identity matcher (query j <-> target j).
def identity_matcher(outputs, targets):
    indices = []
    for t in targets:
        n = t['labels'].shape[0]
        indices.append((jnp.arange(n, dtype=jnp.int32),
                        jnp.arange(n, dtype=jnp.int32)))
    return indices


# ----------------------------------------------------------------------------
# Pure-JAX reference for verification
# ----------------------------------------------------------------------------
def ref_weighted_ce(logits_flat, targets_flat, weight):
    logp = jax.nn.log_softmax(logits_flat.astype(jnp.float32), axis=-1)
    nll = -jnp.take_along_axis(logp, targets_flat[:, None], axis=-1)[:, 0]
    w = weight[targets_flat]
    return jnp.sum(w * nll) / jnp.sum(w)


if __name__ == "__main__":
    key = jax.random.PRNGKey(0)
    B, Q, num_classes = 2, 8, 4
    K = num_classes + 1
    n_aux = 2

    k_main, k_aux, k_lbl = jax.random.split(key, 3)
    pred_logits = jax.random.normal(k_main, (B, Q, K), dtype=jnp.float32)
    aux_outputs = [
        {'pred_logits': jax.random.normal(jax.random.fold_in(k_aux, i),
                                          (B, Q, K), dtype=jnp.float32)}
        for i in range(n_aux)
    ]
    outputs = {'pred_logits': pred_logits, 'aux_outputs': aux_outputs}

    # targets: batch 0 has 3 boxes, batch 1 has 2 boxes
    labels0 = jax.random.randint(jax.random.fold_in(k_lbl, 0), (3,), 0, num_classes)
    labels1 = jax.random.randint(jax.random.fold_in(k_lbl, 1), (2,), 0, num_classes)
    targets = [{'labels': labels0.astype(jnp.int32)},
               {'labels': labels1.astype(jnp.int32)}]

    # deterministic ec_weight -> empty_weight buffer
    ec_weight = jnp.arange(1.0, K + 1.0, dtype=jnp.float32)
    criterion = SetCriterion(
        num_classes=num_classes,
        matcher=identity_matcher,
        weight_dict={'loss_ce': 1.0},
        eos_coef=0.1,
        losses=['labels'],
        ec_weight=ec_weight,
    )

    losses = criterion(outputs, targets)
    losses = jax.tree_util.tree_map(jax.block_until_ready, losses)

    # verify every head against the pure-JAX reference
    idx = identity_matcher(outputs, targets)
    batch_idx, src_idx = criterion._get_src_permutation_idx(idx)
    tco = jnp.concatenate([labels0, labels1]).astype(jnp.int32)
    tc = jnp.full((B, Q), num_classes, dtype=jnp.int32).at[batch_idx, src_idx].set(tco)
    tc_flat = tc.reshape(B * Q)

    head_logits = [pred_logits] + [a['pred_logits'] for a in aux_outputs]
    head_names = ['loss_ce'] + [f'loss_ce_{i}' for i in range(n_aux)]
    for name, lg in zip(head_names, head_logits):
        ref = ref_weighted_ce(lg.reshape(B * Q, K), tc_flat, criterion.empty_weight)
        assert jnp.allclose(losses[name], ref, atol=1e-5, rtol=1e-5), \
            (name, losses[name], ref)
    assert set(losses.keys()) == set(head_names)

    print("KERNEL_OK")
</pallas_src>

<mosaic_0001>
module attributes {stable_mosaic.version = 11 : i64} {
  func.func @_fused_wce_kernel(%arg0: i32, %arg1: i32, %arg2: memref<1x16x5xf32, #tpu.memory_space<vmem>>, %arg3: memref<1x16x1xi32, #tpu.memory_space<vmem>>, %arg4: memref<1x5xf32, #tpu.memory_space<vmem>>, %arg5: memref<1x1x1xf32, #tpu.memory_space<vmem>>, %arg6: memref<1x2xf32, #tpu.memory_space<vmem>>) attributes {dimension_semantics = [#tpu.dimension_semantics<parallel>, #tpu.dimension_semantics<arbitrary>], iteration_bounds = array<i64: 3, 1>, scalar_prefetch = 0 : i64, scratch_operands = 1 : i64, tpu.core_type = #tpu.core_type<tc>, window_params = [{transform_indices = @transform_0, window_bounds = array<i64: 1, 16, 5>}, {transform_indices = @transform_1, window_bounds = array<i64: 1, 16, 1>}, {pipeline_mode = #tpu.pipeline_mode<synchronous>, transform_indices = @transform_2, window_bounds = array<i64: 1, 5>}, {transform_indices = @transform_3, window_bounds = array<i64: 1, 1, 1>}]} {
    %c0_i32 = arith.constant 0 : i32
    %0 = arith.cmpi eq, %arg1, %c0_i32 : i32
    %1 = arith.extui %0 : i1 to i32
    %c0_i32_0 = arith.constant 0 : i32
    %2 = arith.cmpi ne, %1, %c0_i32_0 : i32
    scf.if %2 {
      %cst_24 = arith.constant 0.000000e+00 : f32
      %51 = vector.broadcast %cst_24 : f32 to vector<1x2xf32>
      %c0_25 = arith.constant 0 : index
      %c0_26 = arith.constant 0 : index
      %52 = vector.load %arg6[%c0_25, %c0_26] : memref<1x2xf32, #tpu.memory_space<vmem>>, vector<1x2xf32>
      tpu.vector_store %arg6[%c0_25, %c0_26], %51 {strides = array<i32>} : memref<1x2xf32, #tpu.memory_space<vmem>>, vector<1x2xf32>,
    } else {
    }
    %c0 = arith.constant 0 : index
    %c0_1 = arith.constant 0 : index
    %c0_2 = arith.constant 0 : index
    %3 = vector.load %arg2[%c0, %c0_1, %c0_2] : memref<1x16x5xf32, #tpu.memory_space<vmem>>, vector<1x16x5xf32>
    %4 = vector.shape_cast %3 : vector<1x16x5xf32> to vector<16x5xf32>
    %c0_3 = arith.constant 0 : index
    %c0_4 = arith.constant 0 : index
    %c0_5 = arith.constant 0 : index
    %5 = vector.load %arg3[%c0_3, %c0_4, %c0_5] : memref<1x16x1xi32, #tpu.memory_space<vmem>>, vector<1x16x1xi32>
    %6 = vector.shape_cast %5 : vector<1x16x1xi32> to vector<16x1xi32>
    %c0_6 = arith.constant 0 : index
    %c0_7 = arith.constant 0 : index
    %7 = vector.load %arg4[%c0_6, %c0_7] : memref<1x5xf32, #tpu.memory_space<vmem>>, vector<1x5xf32>
    %8 = tpu.iota {dimensions = array<i32: 1>} : vector<16x5xi32>
    %9 = vector.broadcast %6 : vector<16x1xi32> to vector<16x5xi32>
    %10 = arith.cmpi eq, %8, %9 : vector<16x5xi32>
    %cst = arith.constant dense<0xFF800000> : vector<16xf32>
    %11 = vector.multi_reduction <maximumf>, %4, %cst [1] : vector<16x5xf32> to vector<16xf32>
    %12 = vector.shape_cast %11 : vector<16xf32> to vector<16x1xf32>
    %13 = vector.broadcast %12 : vector<16x1xf32> to vector<16x5xf32>
    %14 = arith.subf %4, %13 : vector<16x5xf32>
    %15 = math.exp %14 : vector<16x5xf32>
    %cst_8 = arith.constant dense<0.000000e+00> : vector<16xf32>
    %16 = vector.multi_reduction <add>, %15, %cst_8 [1] : vector<16x5xf32> to vector<16xf32>
    %17 = vector.shape_cast %16 : vector<16xf32> to vector<16x1xf32>
    %18 = math.log %17 : vector<16x1xf32>
    %19 = arith.addf %12, %18 : vector<16x1xf32>
    %cst_9 = arith.constant 0.000000e+00 : f32
    %20 = vector.broadcast %cst_9 : f32 to vector<16x5xf32>
    %21 = arith.select %10, %4, %20 : vector<16x5xi1>, vector<16x5xf32>
    %cst_10 = arith.constant dense<0.000000e+00> : vector<16xf32>
    %22 = vector.multi_reduction <add>, %21, %cst_10 [1] : vector<16x5xf32> to vector<16xf32>
    %23 = vector.shape_cast %22 : vector<16xf32> to vector<16x1xf32>
    %cst_11 = arith.constant 0.000000e+00 : f32
    %24 = vector.shape_cast %7 : vector<1x5xf32> to vector<1x5xf32>
    %25 = vector.broadcast %24 : vector<1x5xf32> to vector<16x5xf32>
    %26 = vector.broadcast %cst_11 : f32 to vector<16x5xf32>
    %27 = arith.select %10, %25, %26 : vector<16x5xi1>, vector<16x5xf32>
    %cst_12 = arith.constant dense<0.000000e+00> : vector<16xf32>
    %28 = vector.multi_reduction <add>, %27, %cst_12 [1] : vector<16x5xf32> to vector<16xf32>
    %29 = vector.shape_cast %28 : vector<16xf32> to vector<16x1xf32>
    %30 = arith.subf %19, %23 : vector<16x1xf32>
    %31 = arith.mulf %29, %30 : vector<16x1xf32>
    %32 = vector.shape_cast %31 : vector<16x1xf32> to vector<1x16x1xf32>
    %cst_13 = arith.constant dense<0.000000e+00> : vector<1xf32>
    %33 = vector.multi_reduction <add>, %32, %cst_13 [1, 2] : vector<1x16x1xf32> to vector<1xf32>
    %34 = vector.shape_cast %33 : vector<1xf32> to vector<1x1x1xf32>
    %35 = vector.extract %34[0, 0, 0] : f32 from vector<1x1x1xf32>
    %36 = vector.broadcast %35 : f32 to vector<1x1xf32>
    %37 = vector.shape_cast %29 : vector<16x1xf32> to vector<1x16x1xf32>
    %cst_14 = arith.constant dense<0.000000e+00> : vector<1xf32>
    %38 = vector.multi_reduction <add>, %37, %cst_14 [1, 2] : vector<1x16x1xf32> to vector<1xf32>
    %39 = vector.shape_cast %38 : vector<1xf32> to vector<1x1x1xf32>
    %40 = vector.extract %39[0, 0, 0] : f32 from vector<1x1x1xf32>
    %41 = vector.broadcast %40 : f32 to vector<1x1xf32>
    %c0_15 = arith.constant 0 : index
    %c0_16 = arith.constant 0 : index
    %42 = vector.load %arg6[%c0_15, %c0_16] : memref<1x2xf32, #tpu.memory_space<vmem>>, vector<1x1xf32>
    %43 = arith.addf %42, %36 : vector<1x1xf32>
    %c0_17 = arith.constant 0 : index
    %c0_18 = arith.constant 0 : index
    %44 = vector.load %arg6[%c0_17, %c0_18] : memref<1x2xf32, #tpu.memory_space<vmem>>, vector<1x1xf32>
    tpu.vector_store %arg6[%c0_17, %c0_18], %43 {strides = array<i32>} : memref<1x2xf32, #tpu.memory_space<vmem>>, vector<1x1xf32>,
    %c0_19 = arith.constant 0 : index
    %c1 = arith.constant 1 : index
    %45 = vector.load %arg6[%c0_19, %c1] : memref<1x2xf32, #tpu.memory_space<vmem>>, vector<1x1xf32>
    %46 = arith.addf %45, %41 : vector<1x1xf32>
    %c0_20 = arith.constant 0 : index
    %c1_21 = arith.constant 1 : index
    %47 = vector.load %arg6[%c0_20, %c1_21] : memref<1x2xf32, #tpu.memory_space<vmem>>, vector<1x1xf32>
    tpu.vector_store %arg6[%c0_20, %c1_21], %46 {strides = array<i32>} : memref<1x2xf32, #tpu.memory_space<vmem>>, vector<1x1xf32>,
    %c0_i32_22 = arith.constant 0 : i32
    %48 = arith.cmpi eq, %arg1, %c0_i32_22 : i32
    %49 = arith.extui %48 : i1 to i32
    %c0_i32_23 = arith.constant 0 : i32
    %50 = arith.cmpi ne, %49, %c0_i32_23 : i32
    scf.if %50 {
      %c0_24 = arith.constant 0 : index
      %c0_25 = arith.constant 0 : index
      %51 = vector.load %arg6[%c0_24, %c0_25] : memref<1x2xf32, #tpu.memory_space<vmem>>, vector<1x1xf32>
      %c0_26 = arith.constant 0 : index
      %c1_27 = arith.constant 1 : index
      %52 = vector.load %arg6[%c0_26, %c1_27] : memref<1x2xf32, #tpu.memory_space<vmem>>, vector<1x1xf32>
      %53 = arith.divf %51, %52 : vector<1x1xf32>
      %54 = vector.shape_cast %53 : vector<1x1xf32> to vector<1x1x1xf32>
      %c0_28 = arith.constant 0 : index
      %c0_29 = arith.constant 0 : index
      %c0_30 = arith.constant 0 : index
      %55 = vector.load %arg5[%c0_28, %c0_29, %c0_30] : memref<1x1x1xf32, #tpu.memory_space<vmem>>, vector<1x1x1xf32>
      tpu.vector_store %arg5[%c0_28, %c0_29, %c0_30], %54 {strides = array<i32>} : memref<1x1x1xf32, #tpu.memory_space<vmem>>, vector<1x1x1xf32>,
    } else {
    }
    return
  }
  func.func @transform_0(%arg0: i32, %arg1: i32) -> (i32, i32, i32) {
    %c0_i32 = arith.constant 0 : i32
    %c0_i32_0 = arith.constant 0 : i32
    return %arg0, %arg1, %c0_i32 : i32, i32, i32
  }
  func.func @transform_1(%arg0: i32, %arg1: i32) -> (i32, i32, i32) {
    %c0_i32 = arith.constant 0 : i32
    %c0_i32_0 = arith.constant 0 : i32
    return %arg0, %arg1, %c0_i32 : i32, i32, i32
  }
  func.func @transform_2(%arg0: i32, %arg1: i32) -> (i32, i32) {
    %c0_i32 = arith.constant 0 : i32
    %c0_i32_0 = arith.constant 0 : i32
    %c0_i32_1 = arith.constant 0 : i32
    return %c0_i32, %c0_i32_0 : i32, i32
  }
  func.func @transform_3(%arg0: i32, %arg1: i32) -> (i32, i32, i32) {
    %c0_i32 = arith.constant 0 : i32
    %c0_i32_0 = arith.constant 0 : i32
    %c0_i32_1 = arith.constant 0 : i32
    return %arg0, %c0_i32, %c0_i32_0 : i32, i32, i32
  }
}

</mosaic_0001>

<llo_original>
// kernel: tpu_custom_call.1
$region0: #{tpu_custom_call.1}
  #allocation0 [shape = 'u32[]', space=smem, size = 0x4, offset = 0x4, fixed_abs, tag = 'smem constant byte address 0x4 - core index']
  #allocation1 [shape = 'u32[72,128]{1,0:T(1,128)}', space=vmem, size = 0x9000, scoped, tag = 'internal scratch']
  #allocation2 [shape = 'f32[1,2]{1,0:T(1,128)}', space=vmem, size = 0x200, scoped, tag = 'scratch operand']
  %s0 = inlined_call_operand.vmem [shape: f32[3,16,5], index: 0, kind: input, shape index: {}]
  %s1 = inlined_call_operand.vmem [shape: s32[3,16,1], index: 1, kind: input, shape index: {}]
  %s2 = inlined_call_operand.vmem [shape: f32[1,5], index: 2, kind: input, shape index: {}]
  %s3 = inlined_call_operand.vmem [shape: f32[3,1,1], index: 3, kind: output, shape index: {}]
  %s4 = sld [smem:[#allocation0]]
  $region53: #{tpu_custom_call.1} parent=0
    _
  %s6 = ssub.s32 1, %s4
  %s7 = scalar_select 0, %s6, %s4
  loop: start=0, step=1, limit=5
  $region2: #{tpu_custom_call.1} parent=0 // loop_pre_header
    _
  $region3: #{tpu_custom_call.1} parent=0 // loop_header
    %s9 = sphi 0, %s13
    %p10 = scmp.ge.s32.totalorder %s9, 5
    %s16 = sphi 0, %s28
    %s17 = sphi 0, %s24
    %s18 = sphi 0, %s16
    %s19 = sphi 0, %s17
    %s20 = sphi 0, %s18
    %s21 = sphi 0, %s19
    %s33 = sphi 0, %s35
    %s36 = sphi 0, %s33
    %s37 = sphi 0, %s36
    %s53 = sphi 0, %s37
    %s61 = sphi 0, %s63
    %s64 = sphi 0, %s61
    %s65 = sphi 0, %s64
    %s81 = sphi 0, %s65
    %s85 = sphi 0, %s85
    %s87 = sphi 0, %s85
    %s88 = sphi 0, %s87
    %s102 = sphi 0, %s88
    %s108 = sphi 0, %s110
    %s111 = sphi 0, %s108
    %s112 = sphi 0, %s111
    %s128 = sphi 0, %s112
  $region4: #{tpu_custom_call.1} parent=0 // loop_header_branch
    %12 = sbr.rel (%p10) target = $region8
  $region5: #{tpu_custom_call.1} parent=0 // loop_body
    %s14 = ssub.s32 %s9, 1
    %s15 = ssub.s32 %s9, 2
    %s22 = sadd.s32 1, %s17
    %p23 = scmp.ge.s32.totalorder %s22, 1
    %s24 = scalar_select %p23, 0, %s22
    %s25 = sadd.s32 1, %s16
    %s26 = scalar_select %p23, %s25, %s16
    %p27 = scmp.ge.s32.totalorder %s26, 3
    %s28 = scalar_select %p27, 0, %s26
    %s29 = ssub.s32 %s16, %s28
    %s30 = ssub.s32 %s17, %s24
    %s31 = sor.u32 %s29, %s30
    %p32 = scmp.eq.s32.totalorder %s31, 0
    %s34 = sadd.s32 %s33, 1
    %s35 = scalar_select %p32, %s33, %s34
    %p38 = pneg %p32
    %p39 = scmp.eq.s32.totalorder %s9, 2
    %p40 = por %p38, %p39
    %p41 = scmp.ne.s32.totalorder %s33, %s36
    %p42 = scmp.eq.s32.totalorder %s9, 0
    %p43 = por %p41, %p42
    %p44 = scmp.ne.s32.totalorder %s33, %s36
    %p45 = scmp.eq.s32.totalorder %s14, 2
    %p46 = por %p44, %p45
    %p47 = scmp.ne.s32.totalorder %s36, %s37
    %p48 = scmp.eq.s32.totalorder %s14, 0
    %p49 = por %p47, %p48
    %p50 = scmp.ne.s32.totalorder %s36, %s37
    %p51 = scmp.eq.s32.totalorder %s15, 2
    %p52 = por %p50, %p51
    %p54 = scmp.ne.s32.totalorder %s37, %s53
    %p55 = scmp.eq.s32.totalorder %s15, 0
    %p56 = por %p54, %p55
    %s57 = ssub.s32 %s16, %s28
    %s58 = ssub.s32 %s17, %s24
    %s59 = sor.u32 %s57, %s58
    %p60 = scmp.eq.s32.totalorder %s59, 0
    %s62 = sadd.s32 %s61, 1
    %s63 = scalar_select %p60, %s61, %s62
    %p66 = pneg %p60
    %p67 = scmp.eq.s32.totalorder %s9, 2
    %p68 = por %p66, %p67
    %p69 = scmp.ne.s32.totalorder %s61, %s64
    %p70 = scmp.eq.s32.totalorder %s9, 0
    %p71 = por %p69, %p70
    %p72 = scmp.ne.s32.totalorder %s61, %s64
    %p73 = scmp.eq.s32.totalorder %s14, 2
    %p74 = por %p72, %p73
    %p75 = scmp.ne.s32.totalorder %s64, %s65
    %p76 = scmp.eq.s32.totalorder %s14, 0
    %p77 = por %p75, %p76
    %p78 = scmp.ne.s32.totalorder %s64, %s65
    %p79 = scmp.eq.s32.totalorder %s15, 2
    %p80 = por %p78, %p79
    %p82 = scmp.ne.s32.totalorder %s65, %s81
    %p83 = scmp.eq.s32.totalorder %s15, 0
    %p84 = por %p82, %p83
    %s86 = sadd.s32 %s85, 1
    %p89 = scmp.eq.s32.totalorder %s9, 2
    %p90 = scmp.ne.s32.totalorder %s85, %s87
    %p91 = scmp.eq.s32.totalorder %s9, 0
    %p92 = por %p90, %p91
    %p93 = scmp.ne.s32.totalorder %s85, %s87
    %p94 = scmp.eq.s32.totalorder %s14, 2
    %p95 = por %p93, %p94
    %p96 = scmp.ne.s32.totalorder %s87, %s88
    %p97 = scmp.eq.s32.totalorder %s14, 0
    %p98 = por %p96, %p97
    %p99 = scmp.ne.s32.totalorder %s87, %s88
    %p100 = scmp.eq.s32.totalorder %s15, 2
    %p101 = por %p99, %p100
    %p103 = scmp.ne.s32.totalorder %s88, %s102
    %p104 = scmp.eq.s32.totalorder %s15, 0
    %p105 = por %p103, %p104
    %s106 = ssub.s32 %s16, %s28
    %p107 = scmp.eq.s32.totalorder %s106, 0
    %s109 = sadd.s32 %s108, 1
    %s110 = scalar_select %p107, %s108, %s109
    %p113 = pneg %p107
    %p114 = scmp.eq.s32.totalorder %s9, 2
    %p115 = por %p113, %p114
    %p116 = scmp.ne.s32.totalorder %s108, %s111
    %p117 = scmp.eq.s32.totalorder %s9, 0
    %p118 = por %p116, %p117
    %p119 = scmp.ne.s32.totalorder %s108, %s111
    %p120 = scmp.eq.s32.totalorder %s14, 2
    %p121 = por %p119, %p120
    %p122 = scmp.ne.s32.totalorder %s111, %s112
    %p123 = scmp.eq.s32.totalorder %s14, 0
    %p124 = por %p122, %p123
    %p125 = scmp.ne.s32.totalorder %s111, %s112
    %p126 = scmp.eq.s32.totalorder %s15, 2
    %p127 = por %p125, %p126
    %p129 = scmp.ne.s32.totalorder %s112, %s128
    %p130 = scmp.eq.s32.totalorder %s15, 0
    %p131 = por %p129, %p130
    %p132 = scmp.le.s32.totalorder 1, %s9
    %p133 = scmp.lt.s32.totalorder %s9, 4
    %p134 = pnand %p132, %p133
    %p135 = pneg %p134
    // Predicated region
    $region9: #{tpu_custom_call.1} parent=5 // pred_check
      _
    $region10: #{tpu_custom_call.1} parent=5 // pred_check_branch
      %137 = sbr.rel (%p134) target = $region12
    $region11: #{tpu_custom_call.1} parent=5 // pred_region
      %s138 = ssub.s32 %s9, 1
      // Predicated region
      $region13: #{tpu_custom_call.1} parent=11 // pred_check
        %p139 = pneg %p98
      $region14: #{tpu_custom_call.1} parent=11 // pred_check_branch
        %141 = sbr.rel (%p139) target = $region16
      $region15: #{tpu_custom_call.1} parent=11 // pred_region
        _
      $region16: #{tpu_custom_call.1} parent=11 // pred_fallthru
        _
    $region12: #{tpu_custom_call.1} parent=5 // pred_fallthru
      _
    %p142 = scmp.lt.s32.totalorder %s9, 3
    // Predicated region
    $region17: #{tpu_custom_call.1} parent=5 // pred_check
      %p143 = pneg %p142
    $region18: #{tpu_custom_call.1} parent=5 // pred_check_branch
      %145 = sbr.rel (%p143) target = $region20
    $region19: #{tpu_custom_call.1} parent=5 // pred_region
      // Predicated region
      $region21: #{tpu_custom_call.1} parent=19 // pred_check
        %p146 = pneg %p43
      $region22: #{tpu_custom_call.1} parent=19 // pred_check_branch
        %148 = sbr.rel (%p146) target = $region24
      $region23: #{tpu_custom_call.1} parent=19 // pred_region
        %s149 = smul.u32 2, %s17
        %p150 = scmp.lt.s32.totalorder %s16, 2
        %s151 = scalar_select %p150, %s16, 2
        %p152 = scmp.lt.s32.totalorder %s149, 1
        %s153 = scalar_select %p152, %s149, 1
        %s154 = smul.addr %s151, 2
        %s155 = sadd.s32 %s153, %s154
        %s156 = smul.addr %s155, 8
        %s157 = scalar_lea.vmem %s0, %s156
        %s158 = smul.u32 2, %s17
      $region24: #{tpu_custom_call.1} parent=19 // pred_fallthru
        _
      // Predicated region
      $region25: #{tpu_custom_call.1} parent=19 // pred_check
        %p159 = pneg %p71
      $region26: #{tpu_custom_call.1} parent=19 // pred_check_branch
        %161 = sbr.rel (%p159) target = $region28
      $region27: #{tpu_custom_call.1} parent=19 // pred_region
        %s162 = smul.u32 2, %s17
        %p163 = scmp.lt.s32.totalorder %s16, 2
        %s164 = scalar_select %p163, %s16, 2
        %p165 = scmp.lt.s32.totalorder %s162, 1
        %s166 = scalar_select %p165, %s162, 1
        %s167 = smul.addr %s164, 2
        %s168 = sadd.s32 %s166, %s167
        %s169 = smul.addr %s168, 8
        %s170 = scalar_lea.vmem %s1, %s169
        %s171 = smul.u32 2, %s17
      $region28: #{tpu_custom_call.1} parent=19 // pred_fallthru
        _
    $region20: #{tpu_custom_call.1} parent=5 // pred_fallthru
      _
    %p172 = scmp.le.s32.totalorder 1, %s9
    %p173 = scmp.lt.s32.totalorder %s9, 4
    %p174 = pnand %p172, %p173
    %p175 = pneg %p174
    // Predicated region
    $region29: #{tpu_custom_call.1} parent=5 // pred_check
      _
    $region30: #{tpu_custom_call.1} parent=5 // pred_check_branch
      %177 = sbr.rel (%p174) target = $region32
    $region31: #{tpu_custom_call.1} parent=5 // pred_region
      %s178 = ssub.s32 %s9, 1
      %s179 = smul.u32 2, %s19
      %p180 = scmp.lt.s32.totalorder %s18, 2
      %s181 = scalar_select %p180, %s18, 2
      %p182 = scmp.lt.s32.totalorder %s179, 1
      %s183 = scalar_select %p182, %s179, 1
      %s184 = smul.addr %s181, 2
      %s185 = sadd.s32 %s183, %s184
      %s186 = smul.addr %s185, 8
      %s187 = scalar_lea.vmem %s0, %s186
      %p188 = pneg %p49
      %p189 = pneg %p46
      %s190 = smul.u32 2, %s19
      %p191 = scmp.lt.s32.totalorder %s18, 2
      %s192 = scalar_select %p191, %s18, 2
      %p193 = scmp.lt.s32.totalorder %s190, 1
      %s194 = scalar_select %p193, %s190, 1
      %s195 = smul.addr %s192, 2
      %s196 = sadd.s32 %s194, %s195
      %s197 = smul.addr %s196, 8
      %s198 = scalar_lea.vmem %s1, %s197
      %p199 = pneg %p77
      %p200 = pneg %p74
      %p201 = pneg %p98
      %p202 = pneg %p95
      %p203 = pneg %p124
      %p204 = pneg %p121
      %p205 = scmp.lt.s32.totalorder %s18, 2
      %s206 = scalar_select %p205, %s18, 2
      %s207 = scalar_lea.vmem %s3, %s206
      %s208 = smul.u32 2, %s19
      %p209 = scmp.lt.s32.totalorder %s18, 2
      %s210 = scalar_select %p209, %s18, 2
      %p211 = scmp.lt.s32.totalorder %s208, 1
      %s212 = scalar_select %p211, %s208, 1
      %s213 = smul.addr %s210, 2
      %s214 = sadd.s32 %s212, %s213
      %s215 = smul.addr %s214, 8
      %s216 = scalar_lea.vmem %s0, %s215
      %s217 = smul.u32 2, %s19
      %s218 = smul.u32 2, %s19
      %p219 = scmp.lt.s32.totalorder %s18, 2
      %s220 = scalar_select %p219, %s18, 2
      %p221 = scmp.lt.s32.totalorder %s218, 1
      %s222 = scalar_select %p221, %s218, 1
      %s223 = smul.addr %s220, 2
      %s224 = sadd.s32 %s222, %s223
      %s225 = smul.addr %s224, 8
      %s226 = scalar_lea.vmem %s1, %s225
      %s227 = smul.u32 2, %s19
      %p228 = scmp.lt.s32.totalorder %s18, 2
      %s229 = scalar_select %p228, %s18, 2
      %s230 = scalar_lea.vmem %s3, %s229
      %p231 = scmp.eq.s32.totalorder %s19, 0
      // Predicated region
      $region33: #{tpu_custom_call.1} parent=31 // pred_check
        %p232 = pneg %p231
      $region34: #{tpu_custom_call.1} parent=31 // pred_check_branch
        %234 = sbr.rel (%p232) target = $region36
      $region35: #{tpu_custom_call.1} parent=31 // pred_region
        %vm235 = vcmask 8192
        %236 = vst.msk [vmem:[#allocation2] sm:$0x1] %vm235, 0.0
      $region36: #{tpu_custom_call.1} parent=31 // pred_fallthru
        _
      %v237 = vld [vmem:[%s216] sm:$0xff]
      %v238 = vld [vmem:[%s216 + $0x8] sm:$0xff]
      %v239 = vld [vmem:[%s226] sm:$0xff]
      %v240 = vld [vmem:[%s226 + $0x8] sm:$0xff]
      %v241 = vld [vmem:[%s2] sm:$0x1]
      %v242 = vlaneseq
      %v243 = vand.u32 %v242, 127
      %244 = vset.pattern.permute.xlu0 0
      %245 = vperm.xlu0 %244, %v239
      %v246 = vpop.permute.xlu0 %245
      %247 = vset.pattern.permute.xlu0 0
      %248 = vperm.xlu0 %247, %v240
      %v249 = vpop.permute.xlu0 %248
      %vm250 = vcmp.eq.s32.totalorder %v243, %v246
      %vm251 = vcmp.eq.s32.totalorder %v243, %v249
      %vm252 = vcmask 39936
      %v253 = vsel %vm252, %v237, -inf
      %254 = vmax.xlane.f32.xlu0 %v253
      %v255 = vpop.xlane.xlu0 %254
      %v256 = vsel %vm252, %v238, -inf
      %257 = vmax.xlane.f32.xlu0 %v256
      %v258 = vpop.xlane.xlu0 %257
      %v259 = vsub.f32 %v237, %v255
      %v260 = vsub.f32 %v238, %v258
      %v261 = vmul.f32 %v259, 1.442695
      %v262 = vpow.pop %v261
      %v263 = vmul.f32 %v260, 1.442695
      %v264 = vpow.pop %v263
      %v265 = vsel %vm252, %v262, 0.0
      %266 = vadd.xlane.f32.xlu0 %v265
      %v267 = vpop.xlane.xlu0 %266
      %v268 = vsel %vm252, %v264, 0.0
      %269 = vadd.xlane.f32.xlu0 %v268
      %v270 = vpop.xlane.xlu0 %269
      %v271 = vlog2.pop %v267
      %v272 = vmul.f32 %v271, 0.6931472
      %v273 = vlog2.pop %v270
      %v274 = vmul.f32 %v273, 0.6931472
      %v275 = vadd.f32 %v255, %v272
      %v276 = vadd.f32 %v258, %v274
      %v277 = vsel %vm250, %v237, 0.0
      %v278 = vsel %vm251, %v238, 0.0
      %v279 = vsel %vm252, %v277, 0.0
      %280 = vadd.xlane.f32.xlu0 %v279
      %v281 = vpop.xlane.xlu0 %280
      %v282 = vsel %vm252, %v278, 0.0
      %283 = vadd.xlane.f32.xlu0 %v282
      %v284 = vpop.xlane.xlu0 %283
      %v286 = vperm.slane %v241, 0
      %v288 = vsel %vm250, %v286, 0.0
      %v289 = vsel %vm251, %v286, 0.0
      %v290 = vsel %vm252, %v288, 0.0
      %291 = vadd.xlane.f32.xlu0 %v290
      %v292 = vpop.xlane.xlu0 %291
      %v293 = vsel %vm252, %v289, 0.0
      %294 = vadd.xlane.f32.xlu0 %v293
      %v295 = vpop.xlane.xlu0 %294
      %v296 = vsub.f32 %v275, %v281
      %v297 = vsub.f32 %v276, %v284
      %v298 = vmul.f32 %v292, %v296
      %v299 = vmul.f32 %v295, %v297
      %vm300 = vcmask 7168
      %v301 = vsel %vm300, %v298, 0.0
      %v302 = vsel %vm300, %v299, 0.0
      %v303 = vadd.f32 %v301, %v302
      %304 = vadd.xlane.f32.xlu0 %v303
      %v305 = vpop.xlane.xlu0 %304
      %v306 = vrot.slane %v305, 4
      %v307 = vadd.f32 %v305, %v306
      %v308 = vrot.slane %v307, 2
      %v309 = vadd.f32 %v307, %v308
      %v310 = vrot.slane %v309, 1
      %v311 = vadd.f32 %v309, %v310
      %s312 = vtos %v311
      %v313 = vstv %s312
      %v314 = vsel %vm300, %v292, 0.0
      %v315 = vsel %vm300, %v295, 0.0
      %v316 = vadd.f32 %v314, %v315
      %317 = vadd.xlane.f32.xlu0 %v316
      %v318 = vpop.xlane.xlu0 %317
      %v319 = vrot.slane %v318, 4
      %v320 = vadd.f32 %v318, %v319
      %v321 = vrot.slane %v320, 2
      %v322 = vadd.f32 %v320, %v321
      %v323 = vrot.slane %v322, 1
      %v324 = vadd.f32 %v322, %v323
      %s325 = vtos %v324
      %v326 = vstv %s325
      %v327 = vld [vmem:[#allocation2] sm:$0x1]
      %v328 = vadd.f32 %v327, %v313
      %vm329 = vcmask 0
      %330 = vst.msk [vmem:[#allocation2] sm:$0x1] %vm329, %v328
      %v331 = vld [vmem:[#allocation2] sm:$0x1]
      %v332 = vadd.f32 %v331, %v326
      %vm333 = vcmask 8200
      %334 = vst.msk [vmem:[#allocation2] sm:$0x1] %vm333, %v332
      // Predicated region
      $region37: #{tpu_custom_call.1} parent=31 // pred_check
        %p335 = pneg %p231
      $region38: #{tpu_custom_call.1} parent=31 // pred_check_branch
        %337 = sbr.rel (%p335) target = $region40
      $region39: #{tpu_custom_call.1} parent=31 // pred_region
        %v338 = vld [vmem:[#allocation2] sm:$0x1]
        %340 = vrot.lane.b32.xlu0 %v338, 127
        %v341 = vpop.permute.xlu0 %340
        %v343 = vrcp.pop %v341
        %v344 = vmul.f32 %v341, %v343
        %v345 = vsub.f32 1.0, %v344
        %v346 = vmul.f32 %v343, %v345
        %v347 = vadd.f32 %v343, %v346
        %vm348 = vweird.f32 %v341
        %vm349 = vweird.f32 %v343
        %vm350 = vmor %vm348, %vm349
        %v351 = vsel %vm350, %v343, %v347
        %v352 = vand.u32 2147483647, %v341
        %vm353 = vcmp.eq.f32.partialorder %v352, 8.507059e+37
        %v354 = vand.u32 %v341, 2147483648
        %v355 = vor.u32 1.1754944e-38, %v354
        %v356 = vsel %vm353, %v355, %v351
        %v357 = vmul.f32 %v338, %v356
        %358 = vst.msk [vmem:[%s230] sm:$0x1] %vm329, %v357
      $region40: #{tpu_custom_call.1} parent=31 // pred_fallthru
        _
      %p359 = scmp.lt.s32.totalorder %s18, 2
      %s360 = scalar_select %p359, %s18, 2
      %s361 = scalar_lea.vmem %s3, %s360
      // Predicated region
      $region41: #{tpu_custom_call.1} parent=31 // pred_check
        %p362 = pneg %p121
      $region42: #{tpu_custom_call.1} parent=31 // pred_check_branch
        %364 = sbr.rel (%p362) target = $region44
      $region43: #{tpu_custom_call.1} parent=31 // pred_region
        _
      $region44: #{tpu_custom_call.1} parent=31 // pred_fallthru
        _
    $region32: #{tpu_custom_call.1} parent=5 // pred_fallthru
      _
    %p365 = scmp.le.s32.totalorder 2, %s9
    // Predicated region
    $region45: #{tpu_custom_call.1} parent=5 // pred_check
      %p366 = pneg %p365
    $region46: #{tpu_custom_call.1} parent=5 // pred_check_branch
      %368 = sbr.rel (%p366) target = $region48
    $region47: #{tpu_custom_call.1} parent=5 // pred_region
      %s369 = ssub.s32 %s9, 2
      // Predicated region
      $region49: #{tpu_custom_call.1} parent=47 // pred_check
        %p370 = pneg %p127
      $region50: #{tpu_custom_call.1} parent=47 // pred_check_branch
        %372 = sbr.rel (%p370) target = $region52
      $region51: #{tpu_custom_call.1} parent=47 // pred_region
        %p373 = scmp.lt.s32.totalorder %s20, 2
        %s374 = scalar_select %p373, %s20, 2
        %s375 = scalar_lea.vmem %s3, %s374
      $region52: #{tpu_custom_call.1} parent=47 // pred_fallthru
        _
    $region48: #{tpu_custom_call.1} parent=5 // pred_fallthru
      _
  $region6: #{tpu_custom_call.1} parent=0 // loop_footer
    %s13 = sadd.s32 1, %s9
  $region7: #{tpu_custom_call.1} parent=0 // loop_footer_branch
    %8 = sbr.rel target = $region3
  $region8: #{tpu_custom_call.1} parent=0 // loop_exit
    _

</llo_original>
